<compile_context>
chip_gen: v7x
topology: tpu7x:2x2x1
jax: 0.10.0
libtpu: 0.0.40
codegen_flags: <defaults>
</compile_context>

<pallas_src>
import functools

import jax
import jax.numpy as jnp
from jax.experimental import pallas as pl
from jax.experimental.pallas import tpu as pltpu

_MiB = 1024 * 1024


def _round_up(x, m):
    return ((x + m - 1) // m) * m


def _cdiv(a, b):
    return -(-a // b)


# ---------------------------------------------------------------------------
# Kernels
# ---------------------------------------------------------------------------
def _c2c_single_k_kernel(x_ref, w1_ref, b1_ref, w2_ref, b2_ref, o_ref):
    """Grid = (batch tiles,).  Whole in_features fits one tile: no accumulator
    round trip -- bias + ReLU in f32 (VPU) feed the second MXU matmul directly."""
    h = jnp.maximum(
        jnp.dot(x_ref[...], w1_ref[...], preferred_element_type=jnp.float32)
        + b1_ref[...], 0.0)
    out = jnp.dot(h.astype(w2_ref.dtype), w2_ref[...],
                  preferred_element_type=jnp.float32) + b2_ref[...]
    o_ref[...] = out.astype(o_ref.dtype)


def _c2c_multi_k_kernel(x_ref, w1_ref, b1_ref, w2_ref, b2_ref, o_ref, acc_ref):
    """Grid = (batch tiles, K tiles); K (reduction over in_features) is last."""
    k = pl.program_id(1)

    @pl.when(k == 0)
    def _init():
        acc_ref[...] = jnp.zeros_like(acc_ref)

    # First matmul: accumulate x_tile @ W1_tile into the f32 scratch (MXU).
    acc_ref[...] += jnp.dot(x_ref[...], w1_ref[...],
                            preferred_element_type=jnp.float32)

    @pl.when(k == pl.num_programs(1) - 1)
    def _finalize():
        h = jnp.maximum(acc_ref[...] + b1_ref[...], 0.0)
        out = jnp.dot(h.astype(w2_ref.dtype), w2_ref[...],
                      preferred_element_type=jnp.float32) + b2_ref[...]
        o_ref[...] = out.astype(o_ref.dtype)


# ---------------------------------------------------------------------------
# One-time probe: is pipeline_mode=pl.Buffered(1) supported by top-level
# pallas_call on this JAX version?  (Lowering only -- nothing is executed, and
# the real kernel is never wrapped in a broad try/except.)
# ---------------------------------------------------------------------------
_BUFFERED_SUPPORT = None


def _buffered_supported():
    global _BUFFERED_SUPPORT
    if _BUFFERED_SUPPORT is not None:
        return _BUFFERED_SUPPORT
    ok = False
    if hasattr(pl, "Buffered"):
        try:
            def _copy_kernel(x_ref, o_ref):
                o_ref[...] = x_ref[...]

            probe = pl.pallas_call(
                _copy_kernel,
                out_shape=jax.ShapeDtypeStruct((8, 128), jnp.float32),
                grid=(1,),
                in_specs=[pl.BlockSpec((8, 128), lambda i: (0, 0),
                                       pipeline_mode=pl.Buffered(1))],
                out_specs=pl.BlockSpec((8, 128), lambda i: (0, 0)),
            )
            jax.jit(probe).lower(jnp.zeros((8, 128), jnp.float32))
            ok = True
        except Exception:
            ok = False
    _BUFFERED_SUPPORT = ok
    return ok


# ---------------------------------------------------------------------------
# Cached pallas_call builder (static configuration baked into the cache key).
# ---------------------------------------------------------------------------
@functools.lru_cache(maxsize=None)
def _build_call(B, hidden_p, out_p, block_b, block_k, num_k,
                out_dtype_str, use_buffered, vmem_limit, flops, bytes_accessed):
    num_b = _cdiv(B, block_b)
    out_dtype = jnp.dtype(out_dtype_str)

    def const_spec(shape, index_map):
        # Grid-constant operands need only one VMEM buffer when supported.
        if use_buffered:
            return pl.BlockSpec(shape, index_map, pipeline_mode=pl.Buffered(1))
        return pl.BlockSpec(shape, index_map)

    if num_k == 1:
        grid = (num_b,)
        in_specs = [
            pl.BlockSpec((block_b, block_k), lambda i: (i, 0)),      # x (pipelined)
            const_spec((block_k, hidden_p), lambda i: (0, 0)),       # W1 (constant)
            const_spec((1, hidden_p), lambda i: (0, 0)),             # b1
            const_spec((hidden_p, out_p), lambda i: (0, 0)),         # W2
            const_spec((1, out_p), lambda i: (0, 0)),                # b2
        ]
        out_specs = pl.BlockSpec((block_b, out_p), lambda i: (i, 0))
        scratch = []
        kernel = _c2c_single_k_kernel
        dims = ("parallel",)
    else:
        grid = (num_b, num_k)
        in_specs = [
            pl.BlockSpec((block_b, block_k), lambda i, k: (i, k)),   # x (pipelined)
            pl.BlockSpec((block_k, hidden_p), lambda i, k: (k, 0)),  # W1 (varies in k)
            const_spec((1, hidden_p), lambda i, k: (0, 0)),          # b1
            const_spec((hidden_p, out_p), lambda i, k: (0, 0)),      # W2
            const_spec((1, out_p), lambda i, k: (0, 0)),             # b2
        ]
        out_specs = pl.BlockSpec((block_b, out_p), lambda i, k: (i, 0))
        scratch = [pltpu.VMEM((block_b, hidden_p), jnp.float32)]
        kernel = _c2c_multi_k_kernel
        dims = ("parallel", "arbitrary")

    return pl.pallas_call(
        kernel,
        out_shape=jax.ShapeDtypeStruct((B, out_p), out_dtype),
        grid_spec=pltpu.PrefetchScalarGridSpec(
            num_scalar_prefetch=0,
            grid=grid,
            in_specs=in_specs,
            out_specs=out_specs,
            scratch_shapes=scratch,
        ),
        compiler_params=pltpu.CompilerParams(
            dimension_semantics=dims,
            vmem_limit_bytes=int(vmem_limit),
        ),
        cost_estimate=pl.CostEstimate(
            flops=int(flops), transcendentals=0,
            bytes_accessed=int(bytes_accessed)),
    )


# ---------------------------------------------------------------------------
# Public forward
# ---------------------------------------------------------------------------
def concept2clip_forward(x, w1, b1, w2, b2, *, block_b=256, compute_dtype=None,
                         max_block_k=None, vmem_budget_bytes=None):
    """Fused Concept2CLIP forward: relu(x @ W1 + b1) @ W2 + b2.

    Args:
        x:  (B, in_features)
        w1: (in_features, hidden)   (transposed vs. torch's (hidden, in))
        b1: (hidden,) or (1, hidden)
        w2: (hidden, out_features)  (transposed vs. torch's (out, hidden))
        b2: (out_features,) or (1, out_features)
        block_b: requested batch tile rows (aligned / clamped automatically).
        compute_dtype: optional dtype (e.g. jnp.bfloat16) for matmul operands;
            accumulation, bias add and ReLU stay in f32.  Do not use int8 on v7x.
        max_block_k: optional cap on the K tile (mainly for testing the K-tiled path).
        vmem_budget_bytes: optional override of the hardware-derived VMEM budget.
    Returns:
        (B, out_features) in x's original dtype.
    """
    B, in_f = x.shape
    hidden = w1.shape[1]
    out_f = w2.shape[1]
    out_dtype = x.dtype

    # Biases stay f32: they are added to the f32 accumulator / activations.
    b1 = jnp.asarray(b1, jnp.float32).reshape(1, hidden)
    b2 = jnp.asarray(b2, jnp.float32).reshape(1, out_f)
    if compute_dtype is not None:
        x = x.astype(compute_dtype)
        w1 = w1.astype(compute_dtype)
        w2 = w2.astype(compute_dtype)

    x_bytes = jnp.dtype(x.dtype).itemsize
    w_bytes = jnp.dtype(w1.dtype).itemsize
    o_bytes = jnp.dtype(out_dtype).itemsize

    # --- hardware-derived VMEM budget ------------------------------------------
    try:
        vmem_cap = int(pltpu.get_tpu_info().vmem_capacity_bytes)
    except Exception:
        vmem_cap = 64 * _MiB  # conservative (v7x-sized) if the query is unavailable
    if vmem_budget_bytes is None:
        # ~100 MiB on v5e/v6e (128 MiB VMEM), ~36 MiB on v7x (64 MiB VMEM); leaves
        # room for Mosaic internal scratch and the pipelined buffers' headroom.
        vmem_budget_bytes = max(16 * _MiB, vmem_cap - 28 * _MiB)

    # --- lane/sublane-dense padding ---------------------------------------------
    in_f_p = _round_up(in_f, 128)   # pad K only to 128, never to a block_k multiple
    out_p = _round_up(out_f, 128)
    hidden_p = _round_up(hidden, 128)
    hidden_256 = _round_up(hidden, 256)
    if hidden_256 != hidden_p:
        # v6e/v7x MXUs are 256 wide: pad hidden to 256 when the VMEM cost is tiny.
        extra = (hidden_256 - hidden_p) * ((in_f_p + out_p) * w_bytes + 4 * 256)
        if extra <= 2 * _MiB:
            hidden_p = hidden_256

    # --- batch tile --------------------------------------------------------------
    # Sublane packing: 8 rows/vreg for f32, 16 for bf16, 32 for int8/fp8.
    row_align = max(8, 32 // x_bytes)
    bb = min(block_b, _round_up(B, row_align))
    bb = max(row_align, (bb // row_align) * row_align)
    if B > row_align:
        # Guarantee >= 2 batch tiles so both of v7x's TensorCores get work
        # (the batch axis is the only "parallel" axis); negligible cost on v5e/v6e.
        bb = min(bb, _round_up(_cdiv(B, 2), row_align))

    use_buffered = _buffered_supported()
    const_bufs = 1 if use_buffered else 2

    def footprint(bb_, bk_, nk_):
        w1_bufs = const_bufs if nk_ == 1 else 2     # W1 varies over k when tiled
        fp = (2 * bb_ * bk_ * x_bytes               # pipelined x tiles
              + w1_bufs * bk_ * hidden_p * w_bytes  # W1
              + const_bufs * hidden_p * out_p * w_bytes   # W2
              + const_bufs * 4 * (hidden_p + out_p)       # biases (f32)
              + 2 * bb_ * out_p * o_bytes)          # pipelined out tiles
        if nk_ > 1:
            fp += 4 * bb_ * hidden_p                # f32 accumulator scratch
        return fp

    # Candidate batch tiles, descending (shrink block_b before splitting K).
    bb_candidates = []
    b_cur = bb
    while True:
        bb_candidates.append(b_cur)
        if b_cur <= row_align:
            break
        b_cur = max(row_align, ((b_cur // 2) // row_align) * row_align)

    # Candidate K tiles: exact divisors of in_f_p/128 (no extra K padding),
    # largest block_k (fewest K steps) first.
    m = in_f_p // 128
    k_candidates = [d for d in range(m, 0, -1) if m % d == 0]
    if max_block_k is not None:
        lim = max(1, max_block_k // 128)
        kc = [d for d in k_candidates if d <= lim]
        k_candidates = kc if kc else [1]

    block_b_sel, block_k_sel, num_k = bb_candidates[-1], 128, m
    found = False
    for d in k_candidates:                 # fewest K steps first ...
        for b_try in bb_candidates:        # ... shrink block_b before adding K steps
            if footprint(b_try, 128 * d, m // d) <= vmem_budget_bytes:
                block_b_sel, block_k_sel, num_k = b_try, 128 * d, m // d
                found = True
                break
        if found:
            break
    # (If nothing fits the budget we fall through with the smallest configuration.)

    fp = footprint(block_b_sel, block_k_sel, num_k)
    vmem_limit = min(max(16 * _MiB, fp + 8 * _MiB),
                     max(16 * _MiB, vmem_cap - 12 * _MiB))

    # --- zero-pad operands (exact no-op through matmul / bias / ReLU) -------------
    xp = jnp.pad(x, ((0, 0), (0, in_f_p - in_f)))
    w1p = jnp.pad(w1, ((0, in_f_p - in_f), (0, hidden_p - hidden)))
    b1p = jnp.pad(b1, ((0, 0), (0, hidden_p - hidden)))
    w2p = jnp.pad(w2, ((0, hidden_p - hidden), (0, out_p - out_f)))
    b2p = jnp.pad(b2, ((0, 0), (0, out_p - out_f)))

    num_b = _cdiv(B, block_b_sel)
    flops = 2 * B * (in_f_p * hidden_p + hidden_p * out_p)
    w1_streams = num_b if num_k > 1 else 1   # W1 re-streamed per batch tile when K-tiled
    bytes_accessed = (num_b * block_b_sel * in_f_p * x_bytes
                      + w1_streams * in_f_p * hidden_p * w_bytes
                      + hidden_p * out_p * w_bytes
                      + 4 * (hidden_p + out_p)
                      + num_b * block_b_sel * out_p * o_bytes)

    call = _build_call(B, hidden_p, out_p, block_b_sel, block_k_sel, num_k,
                       str(jnp.dtype(out_dtype)), use_buffered, vmem_limit,
                       flops, bytes_accessed)
    out_padded = call(xp, w1p, b1p, w2p, b2p)
    return out_padded[:, :out_f]


def init_params(key, in_features, out_features, hidden_size, dtype=jnp.float32):
    """Deterministic init matching nn.Linear shapes (weights stored transposed)."""
    k1, k2, k3, k4 = jax.random.split(key, 4)
    lim1 = 1.0 / (in_features ** 0.5)
    lim2 = 1.0 / (hidden_size ** 0.5)
    w1 = jax.random.uniform(k1, (in_features, hidden_size), dtype, -lim1, lim1)
    b1 = jax.random.uniform(k2, (hidden_size,), dtype, -lim1, lim1)
    w2 = jax.random.uniform(k3, (hidden_size, out_features), dtype, -lim2, lim2)
    b2 = jax.random.uniform(k4, (out_features,), dtype, -lim2, lim2)
    return w1, b1, w2, b2


if __name__ == "__main__":
    def reference(x, w1, b1, w2, b2):
        return jnp.maximum(x @ w1 + b1[None, :], 0.0) @ w2 + b2[None, :]

    root = jax.random.PRNGKey(0)
    ka_x, ka_p, kb_x, kb_p = jax.random.split(root, 4)

    # Case A: tiny shapes, single grid step, single-K fast path.
    batch, in_f, hidden, out_f = 8, 32, 64, 16
    xa = jax.random.normal(ka_x, (batch, in_f), jnp.float32)
    w1a, b1a, w2a, b2a = init_params(ka_p, in_f, out_f, hidden)
    out_a = jax.block_until_ready(concept2clip_forward(xa, w1a, b1a, w2a, b2a))
    ref_a = reference(xa, w1a, b1a, w2a, b2a)
    assert out_a.shape == (batch, out_f)
    assert jnp.allclose(out_a, ref_a, atol=1e-3, rtol=1e-3), "f32 single-tile mismatch"

    # Case B: ragged shapes exercising batch tiling (partial last tile), K tiling
    # with the accumulator path, and lane padding of hidden/out.
    batch, in_f, hidden, out_f = 20, 384, 96, 40
    xb = jax.random.normal(kb_x, (batch, in_f), jnp.float32)
    w1b, b1b, w2b, b2b = init_params(kb_p, in_f, out_f, hidden)
    out_b = jax.block_until_ready(
        concept2clip_forward(xb, w1b, b1b, w2b, b2b, block_b=8, max_block_k=128))
    ref_b = reference(xb, w1b, b1b, w2b, b2b)
    assert out_b.shape == (batch, out_f)
    assert jnp.allclose(out_b, ref_b, atol=1e-3, rtol=1e-3), "f32 tiled mismatch"

    # Case C: bf16 matmul operands (f32 accumulate / bias / ReLU), 16-row batch tiles.
    out_c = jax.block_until_ready(
        concept2clip_forward(xb, w1b, b1b, w2b, b2b, block_b=8, max_block_k=128,
                             compute_dtype=jnp.bfloat16))
    assert jnp.allclose(out_c, ref_b, atol=5e-2, rtol=5e-2), "bf16 mismatch"

    print("KERNEL_OK")
</pallas_src>

<mosaic_0001>
module attributes {stable_mosaic.version = 11 : i64} {
  func.func @_c2c_single_k_kernel(%arg0: i32, %arg1: memref<8x128xf32, #tpu.memory_space<vmem>>, %arg2: memref<128x256xf32, #tpu.memory_space<vmem>>, %arg3: memref<1x256xf32, #tpu.memory_space<vmem>>, %arg4: memref<256x128xf32, #tpu.memory_space<vmem>>, %arg5: memref<1x128xf32, #tpu.memory_space<vmem>>, %arg6: memref<8x128xf32, #tpu.memory_space<vmem>>) attributes {dimension_semantics = [#tpu.dimension_semantics<parallel>], iteration_bounds = array<i64: 1>, scalar_prefetch = 0 : i64, scratch_operands = 0 : i64, tpu.core_type = #tpu.core_type<tc>, window_params = [{transform_indices = @transform_0, window_bounds = array<i64: 8, 128>}, {pipeline_mode = #tpu.pipeline_mode<synchronous>, transform_indices = @transform_1, window_bounds = array<i64: 128, 256>}, {pipeline_mode = #tpu.pipeline_mode<synchronous>, transform_indices = @transform_2, window_bounds = array<i64: 1, 256>}, {pipeline_mode = #tpu.pipeline_mode<synchronous>, transform_indices = @transform_3, window_bounds = array<i64: 256, 128>}, {pipeline_mode = #tpu.pipeline_mode<synchronous>, transform_indices = @transform_4, window_bounds = array<i64: 1, 128>}, {transform_indices = @transform_5, window_bounds = array<i64: 8, 128>}]} {
    %c0 = arith.constant 0 : index
    %c0_0 = arith.constant 0 : index
    %0 = vector.load %arg1[%c0, %c0_0] : memref<8x128xf32, #tpu.memory_space<vmem>>, vector<8x128xf32>
    %c0_1 = arith.constant 0 : index
    %c0_2 = arith.constant 0 : index
    %1 = vector.load %arg2[%c0_1, %c0_2] : memref<128x256xf32, #tpu.memory_space<vmem>>, vector<128x256xf32>
    %cst = arith.constant dense<0.000000e+00> : vector<8x256xf32>
    %2 = tpu.matmul %0, %1, %cst {dimension_numbers = #tpu.dot_dimension_numbers<[1], [0], [0], [1], [0, 0, 1, 1], [], []>} : vector<8x128xf32>, vector<128x256xf32>, vector<8x256xf32> -> vector<8x256xf32>
    %c0_3 = arith.constant 0 : index
    %c0_4 = arith.constant 0 : index
    %3 = vector.load %arg3[%c0_3, %c0_4] : memref<1x256xf32, #tpu.memory_space<vmem>>, vector<1x256xf32>
    %4 = vector.broadcast %3 : vector<1x256xf32> to vector<8x256xf32>
    %5 = arith.addf %2, %4 : vector<8x256xf32>
    %cst_5 = arith.constant 0.000000e+00 : f32
    %6 = vector.broadcast %cst_5 : f32 to vector<8x256xf32>
    %7 = arith.maximumf %5, %6 : vector<8x256xf32>
    %c0_6 = arith.constant 0 : index
    %c0_7 = arith.constant 0 : index
    %8 = vector.load %arg4[%c0_6, %c0_7] : memref<256x128xf32, #tpu.memory_space<vmem>>, vector<256x128xf32>
    %cst_8 = arith.constant dense<0.000000e+00> : vector<8x128xf32>
    %9 = tpu.matmul %7, %8, %cst_8 {dimension_numbers = #tpu.dot_dimension_numbers<[1], [0], [0], [1], [0, 0, 1, 1], [], []>} : vector<8x256xf32>, vector<256x128xf32>, vector<8x128xf32> -> vector<8x128xf32>
    %c0_9 = arith.constant 0 : index
    %c0_10 = arith.constant 0 : index
    %10 = vector.load %arg5[%c0_9, %c0_10] : memref<1x128xf32, #tpu.memory_space<vmem>>, vector<1x128xf32>
    %11 = vector.broadcast %10 : vector<1x128xf32> to vector<8x128xf32>
    %12 = arith.addf %9, %11 : vector<8x128xf32>
    %c0_11 = arith.constant 0 : index
    %c0_12 = arith.constant 0 : index
    %13 = vector.load %arg6[%c0_11, %c0_12] : memref<8x128xf32, #tpu.memory_space<vmem>>, vector<8x128xf32>
    tpu.vector_store %arg6[%c0_11, %c0_12], %12 {strides = array<i32>} : memref<8x128xf32, #tpu.memory_space<vmem>>, vector<8x128xf32>,
    return
  }
  func.func @transform_0(%arg0: i32) -> (i32, i32) {
    %c0_i32 = arith.constant 0 : i32
    %c0_i32_0 = arith.constant 0 : i32
    return %arg0, %c0_i32 : i32, i32
  }
  func.func @transform_1(%arg0: i32) -> (i32, i32) {
    %c0_i32 = arith.constant 0 : i32
    %c0_i32_0 = arith.constant 0 : i32
    %c0_i32_1 = arith.constant 0 : i32
    return %c0_i32, %c0_i32_0 : i32, i32
  }
  func.func @transform_2(%arg0: i32) -> (i32, i32) {
    %c0_i32 = arith.constant 0 : i32
    %c0_i32_0 = arith.constant 0 : i32
    %c0_i32_1 = arith.constant 0 : i32
    return %c0_i32, %c0_i32_0 : i32, i32
  }
  func.func @transform_3(%arg0: i32) -> (i32, i32) {
    %c0_i32 = arith.constant 0 : i32
    %c0_i32_0 = arith.constant 0 : i32
    %c0_i32_1 = arith.constant 0 : i32
    return %c0_i32, %c0_i32_0 : i32, i32
  }
  func.func @transform_4(%arg0: i32) -> (i32, i32) {
    %c0_i32 = arith.constant 0 : i32
    %c0_i32_0 = arith.constant 0 : i32
    %c0_i32_1 = arith.constant 0 : i32
    return %c0_i32, %c0_i32_0 : i32, i32
  }
  func.func @transform_5(%arg0: i32) -> (i32, i32) {
    %c0_i32 = arith.constant 0 : i32
    %c0_i32_0 = arith.constant 0 : i32
    return %arg0, %c0_i32 : i32, i32
  }
}

</mosaic_0001>

<llo_original>
// kernel: tpu_custom_call.1
$region0: #{tpu_custom_call.1}
  #allocation0 [shape = 'u32[]', space=smem, size = 0x4, offset = 0x4, fixed_abs, tag = 'smem constant byte address 0x4 - core index']
  #allocation1 [shape = 'u32[144,128]{1,0:T(1,128)}', space=vmem, size = 0x12000, scoped, tag = 'internal scratch']
  %s0 = inlined_call_operand.hbm [shape: f32[8,128], index: 0, kind: input, shape index: {}]
  %s1 = inlined_call_operand.hbm [shape: f32[128,256], index: 1, kind: input, shape index: {}]
  %s2 = inlined_call_operand.vmem [shape: f32[1,256], index: 2, kind: input, shape index: {}]
  %s3 = inlined_call_operand.hbm [shape: f32[256,128], index: 3, kind: input, shape index: {}]
  %s4 = inlined_call_operand.vmem [shape: f32[1,128], index: 4, kind: input, shape index: {}]
  %s5 = inlined_call_operand.hbm [shape: f32[8,128], index: 5, kind: output, shape index: {}]
  %s6 = sld [smem:[#allocation0]]
  $region42: #{tpu_custom_call.1} parent=0
    _
  %s8 = ssub.s32 1, %s6
  %s9 = scalar_select 0, %s8, %s6
  $region1: #{tpu_custom_call.1} parent=0
    #allocation2 [shape = 'u8[4096]{0}', space=vmem, size = 0x1000, scoped, tag = 'input window, operand 0, single buffered']
    #allocation3 [shape = 's32[1]{0}', space=sflag, size = 0x4, scoped, tag = 'scoped memory for tpu_custom_call.1']
    #allocation4 [shape = 's32[1]{0}', space=sflag, size = 0x4, scoped, tag = 'scoped memory for tpu_custom_call.1']
    #allocation5 [shape = 'u8[131072]{0}', space=vmem, size = 0x20000, scoped, tag = 'input window, operand 1, single buffered']
    #allocation6 [shape = 's32[1]{0}', space=sflag, size = 0x4, scoped, tag = 'scoped memory for tpu_custom_call.1']
    #allocation7 [shape = 'u8[131072]{0}', space=vmem, size = 0x20000, scoped, tag = 'input window, operand 3, single buffered']
    #allocation8 [shape = 'u8[4096]{0}', space=vmem, size = 0x1000, scoped, tag = 'output window, operand 0, single buffered']
    %10 = vsyncpa [#allocation3], 0
    %11 = vsyncpa [#allocation6], 0
    %12 = vsyncpa [#allocation4], 0
    // Predicated region
    $region2: #{tpu_custom_call.1} parent=1 // pred_check
      _
    $region3: #{tpu_custom_call.1} parent=1 // pred_check_branch
      %14 = sbr.rel (0) target = $region5
    $region4: #{tpu_custom_call.1} parent=1 // pred_region
      %s16 = ssub.s32 128, 128
      %17 = vsyncadd [#allocation3], %s16
      %s19 = sshll.u32 [#allocation2], 4
      %s20 = int_to_ptr.vmem [resolvable:$true] %s19
      %22 = dma.hbm_to_vmem [thread:$0]  %s0, 128, %s20, [#allocation3]
    $region5: #{tpu_custom_call.1} parent=1 // pred_fallthru
      _
    // Predicated region
    $region6: #{tpu_custom_call.1} parent=1 // pred_check
      _
    $region7: #{tpu_custom_call.1} parent=1 // pred_check_branch
      %24 = sbr.rel (0) target = $region9
    $region8: #{tpu_custom_call.1} parent=1 // pred_region
      %s26 = ssub.s32 4096, 4096
      %27 = vsyncadd [#allocation6], %s26
      %s28 = sshll.u32 [#allocation5], 4
      %s29 = int_to_ptr.vmem [resolvable:$true] %s28
      %34 = dma.hbm_to_vmem [thread:$0]  %s1, 4096, %s29, [#allocation6], 256, 256, 16
    $region9: #{tpu_custom_call.1} parent=1 // pred_fallthru
      _
    // Predicated region
    $region10: #{tpu_custom_call.1} parent=1 // pred_check
      _
    $region11: #{tpu_custom_call.1} parent=1 // pred_check_branch
      %36 = sbr.rel (0) target = $region13
    $region12: #{tpu_custom_call.1} parent=1 // pred_region
      _
    $region13: #{tpu_custom_call.1} parent=1 // pred_fallthru
      _
    // Predicated region
    $region14: #{tpu_custom_call.1} parent=1 // pred_check
      _
    $region15: #{tpu_custom_call.1} parent=1 // pred_check_branch
      %38 = sbr.rel (0) target = $region17
    $region16: #{tpu_custom_call.1} parent=1 // pred_region
      %s40 = ssub.s32 4096, 4096
      %41 = vsyncadd [#allocation6], %s40
      %s42 = sshll.u32 [#allocation7], 4
      %s43 = int_to_ptr.vmem [resolvable:$true] %s42
      %48 = dma.hbm_to_vmem [thread:$0]  %s3, 4096, %s43, [#allocation6], 128, 128, 8
    $region17: #{tpu_custom_call.1} parent=1 // pred_fallthru
      _
    // Predicated region
    $region18: #{tpu_custom_call.1} parent=1 // pred_check
      _
    $region19: #{tpu_custom_call.1} parent=1 // pred_check_branch
      %50 = sbr.rel (0) target = $region21
    $region20: #{tpu_custom_call.1} parent=1 // pred_region
      _
    $region21: #{tpu_custom_call.1} parent=1 // pred_fallthru
      _
    // Predicated region
    $region22: #{tpu_custom_call.1} parent=1 // pred_check
      _
    $region23: #{tpu_custom_call.1} parent=1 // pred_check_branch
      %52 = sbr.rel (0) target = $region25
    $region24: #{tpu_custom_call.1} parent=1 // pred_region
      %53 = dma.done [#allocation3], 128
    $region25: #{tpu_custom_call.1} parent=1 // pred_fallthru
      _
    // Predicated region
    $region26: #{tpu_custom_call.1} parent=1 // pred_check
      _
    $region27: #{tpu_custom_call.1} parent=1 // pred_check_branch
      %55 = sbr.rel (0) target = $region29
    $region28: #{tpu_custom_call.1} parent=1 // pred_region
      %56 = dma.done [#allocation6], 4096
    $region29: #{tpu_custom_call.1} parent=1 // pred_fallthru
      _
    // Predicated region
    $region30: #{tpu_custom_call.1} parent=1 // pred_check
      _
    $region31: #{tpu_custom_call.1} parent=1 // pred_check_branch
      %58 = sbr.rel (0) target = $region33
    $region32: #{tpu_custom_call.1} parent=1 // pred_region
      %59 = dma.done [#allocation6], 4096
    $region33: #{tpu_custom_call.1} parent=1 // pred_fallthru
      _
    %v60 = vld [vmem:[#allocation2] sm:$0xff]
    %v61 = vld [vmem:[#allocation5] sm:$0xff]
    %v62 = vld [vmem:[#allocation5 + $0x8] sm:$0xff]
    %v63 = vld [vmem:[#allocation5 + $0x10] sm:$0xff]
    %v64 = vld [vmem:[#allocation5 + $0x18] sm:$0xff]
    %v65 = vld [vmem:[#allocation5 + $0x20] sm:$0xff]
    %v66 = vld [vmem:[#allocation5 + $0x28] sm:$0xff]
    %v67 = vld [vmem:[#allocation5 + $0x30] sm:$0xff]
    %v68 = vld [vmem:[#allocation5 + $0x38] sm:$0xff]
    %v69 = vld [vmem:[#allocation5 + $0x40] sm:$0xff]
    %v70 = vld [vmem:[#allocation5 + $0x48] sm:$0xff]
    %v71 = vld [vmem:[#allocation5 + $0x50] sm:$0xff]
    %v72 = vld [vmem:[#allocation5 + $0x58] sm:$0xff]
    %v73 = vld [vmem:[#allocation5 + $0x60] sm:$0xff]
    %v74 = vld [vmem:[#allocation5 + $0x68] sm:$0xff]
    %v75 = vld [vmem:[#allocation5 + $0x70] sm:$0xff]
    %v76 = vld [vmem:[#allocation5 + $0x78] sm:$0xff]
    %v77 = vld [vmem:[#allocation5 + $0x80] sm:$0xff]
    %v78 = vld [vmem:[#allocation5 + $0x88] sm:$0xff]
    %v79 = vld [vmem:[#allocation5 + $0x90] sm:$0xff]
    %v80 = vld [vmem:[#allocation5 + $0x98] sm:$0xff]
    %v81 = vld [vmem:[#allocation5 + $0xa0] sm:$0xff]
    %v82 = vld [vmem:[#allocation5 + $0xa8] sm:$0xff]
    %v83 = vld [vmem:[#allocation5 + $0xb0] sm:$0xff]
    %v84 = vld [vmem:[#allocation5 + $0xb8] sm:$0xff]
    %v85 = vld [vmem:[#allocation5 + $0xc0] sm:$0xff]
    %v86 = vld [vmem:[#allocation5 + $0xc8] sm:$0xff]
    %v87 = vld [vmem:[#allocation5 + $0xd0] sm:$0xff]
    %v88 = vld [vmem:[#allocation5 + $0xd8] sm:$0xff]
    %v89 = vld [vmem:[#allocation5 + $0xe0] sm:$0xff]
    %v90 = vld [vmem:[#allocation5 + $0xe8] sm:$0xff]
    %v91 = vld [vmem:[#allocation5 + $0xf0] sm:$0xff]
    %v92 = vld [vmem:[#allocation5 + $0xf8] sm:$0xff]
    %v93 = vld [vmem:[%s2] sm:$0x3]
    %v95 = vlaneseq
    %v96 = vshrl.u32 %v95, 7
    %v97 = vsub.s32 0, %v96
    %v98 = vrot.slane %v93, %v97
    %v99 = vlaneseq
    %v100 = vshrl.u32 %v99, 7
    %v101 = vsub.s32 1, %v100
    %v102 = vrot.slane %v93, %v101
    %105 = vmatprep.subr.mxu0 %v62
    %106 = vmatpush1.msra.mxu0 %v61
    %107 = vmatprep.subr.mxu0 %v64
    %108 = vmatpush1.msra.mxu0 %v63
    %109 = vmatprep.subr.mxu0 %v66
    %110 = vmatpush1.msra.mxu0 %v65
    %111 = vmatprep.subr.mxu0 %v68
    %112 = vmatpush1.msra.mxu0 %v67
    %113 = vmatprep.subr.mxu0 %v70
    %114 = vmatpush1.msra.mxu0 %v69
    %115 = vmatprep.subr.mxu0 %v72
    %116 = vmatpush1.msra.mxu0 %v71
    %117 = vmatprep.subr.mxu0 %v74
    %118 = vmatpush1.msra.mxu0 %v73
    %119 = vmatprep.subr.mxu0 %v76
    %120 = vmatpush1.msra.mxu0 %v75
    %121 = vmatprep.subr.mxu0 %v78
    %122 = vmatpush1.msra.mxu0 %v77
    %123 = vmatprep.subr.mxu0 %v80
    %124 = vmatpush1.msra.mxu0 %v79
    %125 = vmatprep.subr.mxu0 %v82
    %126 = vmatpush1.msra.mxu0 %v81
    %127 = vmatprep.subr.mxu0 %v84
    %128 = vmatpush1.msra.mxu0 %v83
    %129 = vmatprep.subr.mxu0 %v86
    %130 = vmatpush1.msra.mxu0 %v85
    %131 = vmatprep.subr.mxu0 %v88
    %132 = vmatpush1.msra.mxu0 %v87
    %133 = vmatprep.subr.mxu0 %v90
    %134 = vmatpush1.msra.mxu0 %v89
    %135 = vmatprep.subr.mxu0 %v92
    %136 = vmatpush1.msra.mxu0 %v91
    %137 = vmatprep.subr.mxu0 0.0
    %138 = vmatpush1.msra.mxu0 0.0
    %139 = vmatprep.subr.mxu0 0.0
    %140 = vmatpush1.msra.mxu0 0.0
    %141 = vmatprep.subr.mxu0 0.0
    %142 = vmatpush1.msra.mxu0 0.0
    %143 = vmatprep.subr.mxu0 0.0
    %144 = vmatpush1.msra.mxu0 0.0
    %145 = vmatprep.subr.mxu0 0.0
    %146 = vmatpush1.msra.mxu0 0.0
    %147 = vmatprep.subr.mxu0 0.0
    %148 = vmatpush1.msra.mxu0 0.0
    %149 = vmatprep.subr.mxu0 0.0
    %150 = vmatpush1.msra.mxu0 0.0
    %151 = vmatprep.subr.mxu0 0.0
    %152 = vmatpush1.msra.mxu0 0.0
    %153 = vmatprep.subr.mxu0 0.0
    %154 = vmatpush1.msra.mxu0 0.0
    %155 = vmatprep.subr.mxu0 0.0
    %156 = vmatpush1.msra.mxu0 0.0
    %157 = vmatprep.subr.mxu0 0.0
    %158 = vmatpush1.msra.mxu0 0.0
    %159 = vmatprep.subr.mxu0 0.0
    %160 = vmatpush1.msra.mxu0 0.0
    %161 = vmatprep.subr.mxu0 0.0
    %162 = vmatpush1.msra.mxu0 0.0
    %163 = vmatprep.subr.mxu0 0.0
    %164 = vmatpush1.msra.mxu0 0.0
    %165 = vmatprep.subr.mxu0 0.0
    %166 = vmatpush1.msra.mxu0 0.0
    %167 = vmatprep.subr.mxu0 0.0
    %168 = vmatpush1.msra.mxu0 0.0
    %169 = vmatprep.mubr.f32.mxu0 0.0
    %170 = vmatmul.mubr.f32.gmra.mrb[0].mxu0 %v60
    %v171 = vpop.f32.mrb[0].mxu0
    %v172 = vadd.f32 %v98, %v171
    %v173 = vpop.f32.mrb[0].mxu0
    %v174 = vadd.f32 %v102, %v173
    %175 = vdwg.mxu0
    %v176 = vmax.f32 %v172, 0.0
    %v177 = vmax.f32 %v174, 0.0
    %v178 = vld [vmem:[#allocation7] sm:$0xff]
    %v179 = vld [vmem:[#allocation7 + $0x8] sm:$0xff]
    %v180 = vld [vmem:[#allocation7 + $0x10] sm:$0xff]
    %v181 = vld [vmem:[#allocation7 + $0x18] sm:$0xff]
    %v182 = vld [vmem:[#allocation7 + $0x20] sm:$0xff]
    %v183 = vld [vmem:[#allocation7 + $0x28] sm:$0xff]
    %v184 = vld [vmem:[#allocation7 + $0x30] sm:$0xff]
    %v185 = vld [vmem:[#allocation7 + $0x38] sm:$0xff]
    %v186 = vld [vmem:[#allocation7 + $0x40] sm:$0xff]
    %v187 = vld [vmem:[#allocation7 + $0x48] sm:$0xff]
    %v188 = vld [vmem:[#allocation7 + $0x50] sm:$0xff]
    %v189 = vld [vmem:[#allocation7 + $0x58] sm:$0xff]
    %v190 = vld [vmem:[#allocation7 + $0x60] sm:$0xff]
    %v191 = vld [vmem:[#allocation7 + $0x68] sm:$0xff]
    %v192 = vld [vmem:[#allocation7 + $0x70] sm:$0xff]
    %v193 = vld [vmem:[#allocation7 + $0x78] sm:$0xff]
    %v194 = vld [vmem:[#allocation7 + $0x80] sm:$0xff]
    %v195 = vld [vmem:[#allocation7 + $0x88] sm:$0xff]
    %v196 = vld [vmem:[#allocation7 + $0x90] sm:$0xff]
    %v197 = vld [vmem:[#allocation7 + $0x98] sm:$0xff]
    %v198 = vld [vmem:[#allocation7 + $0xa0] sm:$0xff]
    %v199 = vld [vmem:[#allocation7 + $0xa8] sm:$0xff]
    %v200 = vld [vmem:[#allocation7 + $0xb0] sm:$0xff]
    %v201 = vld [vmem:[#allocation7 + $0xb8] sm:$0xff]
    %v202 = vld [vmem:[#allocation7 + $0xc0] sm:$0xff]
    %v203 = vld [vmem:[#allocation7 + $0xc8] sm:$0xff]
    %v204 = vld [vmem:[#allocation7 + $0xd0] sm:$0xff]
    %v205 = vld [vmem:[#allocation7 + $0xd8] sm:$0xff]
    %v206 = vld [vmem:[#allocation7 + $0xe0] sm:$0xff]
    %v207 = vld [vmem:[#allocation7 + $0xe8] sm:$0xff]
    %v208 = vld [vmem:[#allocation7 + $0xf0] sm:$0xff]
    %v209 = vld [vmem:[#allocation7 + $0xf8] sm:$0xff]
    %v210 = vld [vmem:[%s4] sm:$0x1]
    %v212 = vlaneseq
    %v213 = vshrl.u32 %v212, 7
    %v214 = vsub.s32 0, %v213
    %v215 = vrot.slane %v210, %v214
    %217 = vmatprep.subr.mxu0 0.0
    %218 = vmatpush1.msra.mxu0 %v178
    %219 = vmatprep.subr.mxu0 0.0
    %220 = vmatpush1.msra.mxu0 %v179
    %221 = vmatprep.subr.mxu0 0.0
    %222 = vmatpush1.msra.mxu0 %v180
    %223 = vmatprep.subr.mxu0 0.0
    %224 = vmatpush1.msra.mxu0 %v181
    %225 = vmatprep.subr.mxu0 0.0
    %226 = vmatpush1.msra.mxu0 %v182
    %227 = vmatprep.subr.mxu0 0.0
    %228 = vmatpush1.msra.mxu0 %v183
    %229 = vmatprep.subr.mxu0 0.0
    %230 = vmatpush1.msra.mxu0 %v184
    %231 = vmatprep.subr.mxu0 0.0
    %232 = vmatpush1.msra.mxu0 %v185
    %233 = vmatprep.subr.mxu0 0.0
    %234 = vmatpush1.msra.mxu0 %v186
    %235 = vmatprep.subr.mxu0 0.0
    %236 = vmatpush1.msra.mxu0 %v187
    %237 = vmatprep.subr.mxu0 0.0
    %238 = vmatpush1.msra.mxu0 %v188
    %239 = vmatprep.subr.mxu0 0.0
    %240 = vmatpush1.msra.mxu0 %v189
    %241 = vmatprep.subr.mxu0 0.0
    %242 = vmatpush1.msra.mxu0 %v190
    %243 = vmatprep.subr.mxu0 0.0
    %244 = vmatpush1.msra.mxu0 %v191
    %245 = vmatprep.subr.mxu0 0.0
    %246 = vmatpush1.msra.mxu0 %v192
    %247 = vmatprep.subr.mxu0 0.0
    %248 = vmatpush1.msra.mxu0 %v193
    %249 = vmatprep.subr.mxu0 0.0
    %250 = vmatpush1.msra.mxu0 %v194
    %251 = vmatprep.subr.mxu0 0.0
    %252 = vmatpush1.msra.mxu0 %v195
    %253 = vmatprep.subr.mxu0 0.0
    %254 = vmatpush1.msra.mxu0 %v196
    %255 = vmatprep.subr.mxu0 0.0
    %256 = vmatpush1.msra.mxu0 %v197
    %257 = vmatprep.subr.mxu0 0.0
    %258 = vmatpush1.msra.mxu0 %v198
    %259 = vmatprep.subr.mxu0 0.0
    %260 = vmatpush1.msra.mxu0 %v199
    %261 = vmatprep.subr.mxu0 0.0
    %262 = vmatpush1.msra.mxu0 %v200
    %263 = vmatprep.subr.mxu0 0.0
    %264 = vmatpush1.msra.mxu0 %v201
    %265 = vmatprep.subr.mxu0 0.0
    %266 = vmatpush1.msra.mxu0 %v202
    %267 = vmatprep.subr.mxu0 0.0
    %268 = vmatpush1.msra.mxu0 %v203
    %269 = vmatprep.subr.mxu0 0.0
    %270 = vmatpush1.msra.mxu0 %v204
    %271 = vmatprep.subr.mxu0 0.0
    %272 = vmatpush1.msra.mxu0 %v205
    %273 = vmatprep.subr.mxu0 0.0
    %274 = vmatpush1.msra.mxu0 %v206
    %275 = vmatprep.subr.mxu0 0.0
    %276 = vmatpush1.msra.mxu0 %v207
    %277 = vmatprep.subr.mxu0 0.0
    %278 = vmatpush1.msra.mxu0 %v208
    %279 = vmatprep.subr.mxu0 0.0
    %280 = vmatpush1.msra.mxu0 %v209
    %281 = vmatprep.mubr.f32.mxu0 %v177
    %282 = vmatmul.mubr.f32.gmra.mrb[0].mxu0 %v176
    %v283 = vpop.f32.mrb[0].mxu0
    %v284 = vadd.f32 %v215, %v283
    %v285 = vpop.f32.mrb[0].mxu0
    %286 = vdwg.mxu0
    %287 = vst [vmem:[#allocation8] sm:$0xff] %v284
    // Predicated region
    $region34: #{tpu_custom_call.1} parent=1 // pred_check
      _
    $region35: #{tpu_custom_call.1} parent=1 // pred_check_branch
      %289 = sbr.rel (0) target = $region37
    $region36: #{tpu_custom_call.1} parent=1 // pred_region
      %s291 = ssub.s32 128, 128
      %292 = vsyncadd [#allocation4], %s291
      %s294 = sshll.u32 [#allocation8], 4
      %s295 = int_to_ptr.vmem [resolvable:$true] %s294
      %297 = dma.vmem_to_hbm [thread:$0]  %s295, 128, %s5, [#allocation4]
    $region37: #{tpu_custom_call.1} parent=1 // pred_fallthru
      _
    // Predicated region
    $region38: #{tpu_custom_call.1} parent=1 // pred_check
      _
    $region39: #{tpu_custom_call.1} parent=1 // pred_check_branch
      %299 = sbr.rel (0) target = $region41
    $region40: #{tpu_custom_call.1} parent=1 // pred_region
      %300 = dma.done [#allocation4], 128
    $region41: #{tpu_custom_call.1} parent=1 // pred_fallthru
      _
    %301 = vsyncpa [#allocation3], 1
    %302 = vsyncpa [#allocation6], 1
    %303 = vsyncpa [#allocation4], 1

</llo_original>
